<compile_context>
chip_gen: v6e
topology: v6e:2x2x1
jax: 0.10.0
libtpu: 0.0.40
codegen_flags: <defaults>
</compile_context>

<pallas_src>
import functools

import jax
import jax.numpy as jnp
import numpy as np
from jax.experimental import pallas as pl
from jax.experimental.pallas import tpu as pltpu

# ----------------------------- configuration --------------------------------
NUM_EMBEDDINGS = 256          # K in the paper
EMBEDDING_DIM = 32            # d in the paper
NUM_HASHES = 2                # k in the paper
NUM_BUCKETS_ARG = 128         # constructor arg -> self.num_buckets = 127
NUM_BUCKETS = NUM_BUCKETS_ARG - 1          # hash bins B (= 127)
SHARED_ROWS = NUM_BUCKETS + 1              # shared_embeddings rows (= 128)
OUTPUT_DIM = EMBEDDING_DIM + NUM_HASHES    # append_weight=True, combiner='sum'

# Deterministic universal-hash parameters.  p < 2**20 and a < 2**17 so the
# split-multiply below is exact in int32 for any non-negative int32 id.
HASH_MODULER = 1_000_003                   # prime p > bins
HASH_PARAMS = ((92821, 689), (54323, 12345))   # (a, b) per hash function

MAX_TOKEN_TILE = 2048         # tokens per grid step (lane axis); multiple of 256


def _cdiv(a, b):
    return (a + b - 1) // b


def _round_up(a, b):
    return _cdiv(a, b) * b


# ------------------------------ hash helpers ---------------------------------
def _hash_residue_i32(xr, a, b, p):
    """Exact (a*x + b) % p using only int32 intermediates, given xr = x % p.

    a is split into 8-bit limbs; with a < 2**17 and p < 2**20 every intermediate
    product stays below 2**31, so this matches int64 math for any non-negative x.
    """
    a_hi, a_lo = a >> 8, a & 0xFF
    t_hi = (a_hi * xr) % p             # a_hi < 2**9  -> product < 2**29
    t_lo = (a_lo * xr) % p             # a_lo < 2**8  -> product < 2**28
    return ((t_hi * 256) % p + t_lo + b) % p     # < p < 2**20


def _mod_bins(x, bins):
    """x % bins for 0 <= x < 2**21; cheap Mersenne fold when bins == 127."""
    if bins == 127:                    # 127 == 2**7 - 1
        s = (x & 127) + ((x >> 7) & 127) + (x >> 14)   # <= 317
        s = (s & 127) + (s >> 7)                       # <= 129
        return jnp.where(s >= 127, s - 127, s)
    return x % bins


# ------------------------------- kernel -------------------------------------
def _hash_embedding_kernel(ids_ref, embt_ref, impq_ref, out_ref, *,
                           hash_params, moduler, bins, num_embeddings,
                           num_hashes, embedding_dim, shared_rows):
    ids = ids_ref[0]                                   # (1, T) int32, lane-dense
    t = ids.shape[1]
    d, h_n = embedding_dim, num_hashes

    # One shared (128, T) iota feeds the importance one-hot and both hash one-hots.
    rows = jax.lax.broadcasted_iota(jnp.int32, (shared_rows, t), 0)

    # ---- importance weights  iw = P[id % K]   (K = 256 = 2 * 128) ----
    # Decompose id%K into low 7 bits (one-hot matmul against the stacked
    # (2H, 128) table) + high bit (row select) -> no (256, T) one-hot slab.
    idm = ids & (num_embeddings - 1)                   # ids % K (K power of two)
    low = idm & 127
    high = idm >> 7                                    # 0 / 1
    onehot_low = (rows == low).astype(jnp.float32)     # (128, T)
    m = jnp.dot(impq_ref[...], onehot_low,
                preferred_element_type=jnp.float32)    # (2H, T)
    iw = jnp.where(high > 0, m[h_n:2 * h_n, :], m[0:h_n, :])   # (H, T)

    # ---- hash gathers: unweighted per-hash one-hot, matmul, post-scale ----
    xr = ids % moduler                                 # hoisted: shared by all hashes
    is_zero = ids == 0
    acc = None
    for hi, (a, b) in enumerate(hash_params):
        bucket = _mod_bins(_hash_residue_i32(xr, a, b, moduler), bins)
        bucket = jnp.where(is_zero, 0, bucket)         # masked_fill_(input == 0, 0)
        onehot = (rows == bucket).astype(jnp.float32)              # (S, T)
        part = jnp.dot(embt_ref[...], onehot,
                       preferred_element_type=jnp.float32)         # (D, T)
        part = part * iw[hi:hi + 1, :]                 # (1, T) broadcast scale
        acc = part if acc is None else acc + part

    # Single merged (D+H, T) lane-dense output: rows [0:D] = emb, [D:D+H] = iw.
    out_ref[0:d, :] = acc.astype(out_ref.dtype)
    out_ref[d:d + h_n, :] = iw.astype(out_ref.dtype)


# ------------------------------- wrapper -------------------------------------
def hash_embedding_forward(ids, shared_emb, imp_w, *, token_tile=MAX_TOKEN_TILE):
    n, w = ids.shape
    s, d = shared_emb.shape          # (SHARED_ROWS, D) = (128, 32)
    k, h = imp_w.shape               # (NUM_EMBEDDINGS, NUM_HASHES) = (256, 2)
    assert s == 128 and k == 2 * s, "fused kernel assumes S=128 buckets, K=256"
    assert token_tile % 256 == 0

    flat = ids.reshape(-1).astype(jnp.int32)
    nw = flat.shape[0]
    nw128 = _round_up(max(nw, 1), 128)
    # Aim for >= 2 grid steps whenever possible so v7x megacore shards the
    # "parallel" grid axis across both TensorCores; keep lanes full (>=128).
    n_target = max(2, _cdiv(nw128, token_tile))
    tile = min(token_tile, max(128, _round_up(_cdiv(nw128, n_target), 128)))
    nw_pad = _round_up(nw128, tile)
    n_tiles = nw_pad // tile
    flat = jnp.pad(flat, (0, nw_pad - nw))
    ids3 = flat.reshape(n_tiles, 1, tile)              # token axis on lanes

    # Wrapper-side layout plumbing (tiny, one-off): transposed shared table and
    # split importance table (rows [0:H] = P[0:128].T, rows [H:2H] = P[128:256].T).
    emb_t = shared_emb.T.astype(jnp.float32)                          # (D, S)
    imp_q = jnp.concatenate([imp_w[:s, :].T, imp_w[s:, :].T],
                            axis=0).astype(jnp.float32)               # (2H, 128)

    kernel = functools.partial(
        _hash_embedding_kernel,
        hash_params=HASH_PARAMS, moduler=HASH_MODULER, bins=NUM_BUCKETS,
        num_embeddings=k, num_hashes=h, embedding_dim=d, shared_rows=s)

    out = pl.pallas_call(
        kernel,
        out_shape=jax.ShapeDtypeStruct((d + h, nw_pad), jnp.float32),
        grid=(n_tiles,),
        in_specs=[
            pl.BlockSpec((1, 1, tile), lambda i: (i, 0, 0)),   # ids tile (lane-dense)
            pl.BlockSpec((d, s), lambda i: (0, 0)),            # E.T      (full table)
            pl.BlockSpec((2 * h, s), lambda i: (0, 0)),        # split P.T (full table)
        ],
        out_specs=pl.BlockSpec((d + h, tile), lambda i: (0, i)),
        compiler_params=pltpu.CompilerParams(
            dimension_semantics=("parallel",),
            vmem_limit_bytes=32 * 1024 * 1024),
    )(ids3, emb_t, imp_q)

    # Single transpose + reshape; no concatenate pass over the result.
    return out[:, :nw].T.reshape(n, w, d + h)


# ----------------------- pure-JAX reference (for check) ----------------------
def hash_embedding_reference(ids, shared_emb, imp_w):
    ids = ids.astype(jnp.int32)
    iw = imp_w[ids % NUM_EMBEDDINGS]                     # (N, W, H)
    embs = []
    for a, b in HASH_PARAMS:
        res = _hash_residue_i32(ids % HASH_MODULER, a, b, HASH_MODULER)
        hidx = res % NUM_BUCKETS                         # plain % (checks the fold)
        hidx = jnp.where(ids == 0, 0, hidx)
        embs.append(shared_emb[hidx])                    # (N, W, D)
    stacked = jnp.stack(embs, axis=-1)                   # (N, W, D, H)
    we = jnp.sum(iw[..., None, :] * stacked, axis=-1)    # (N, W, D)
    return jnp.concatenate([we, iw], axis=-1)            # (N, W, D + H)


# --------------------------------- main --------------------------------------
if __name__ == "__main__":
    key = jax.random.PRNGKey(0)
    k_shared, k_imp, k_ids, k_ids2, k_ids3 = jax.random.split(key, 5)

    # reset_parameters(): normal(std=0.1) for shared pool, normal(std=0.0005)
    # for importance weights (padding_idx is None -> no zero row).
    shared_emb = 0.1 * jax.random.normal(
        k_shared, (SHARED_ROWS, EMBEDDING_DIM), dtype=jnp.float32)
    imp_w = 0.0005 * jax.random.normal(
        k_imp, (NUM_EMBEDDINGS, NUM_HASHES), dtype=jnp.float32)

    # Small case: (N, W) word indices, with a 0 to exercise the masked_fill_ path.
    N, W = 2, 8
    ids = jax.random.randint(k_ids, (N, W), 0, 300, dtype=jnp.int32)
    ids = ids.at[0, 0].set(0)
    out = jax.block_until_ready(hash_embedding_forward(ids, shared_emb, imp_w))
    ref = hash_embedding_reference(ids, shared_emb, imp_w)
    assert out.shape == (N, W, OUTPUT_DIM)
    np.testing.assert_allclose(np.asarray(out), np.asarray(ref),
                               rtol=1e-5, atol=1e-6)

    # Medium case: two grid steps (tile=640), tail padding, large ids.
    N2, W2 = 4, 320
    ids2 = jax.random.randint(k_ids2, (N2, W2), 0, 50_000, dtype=jnp.int32)
    ids2 = ids2.at[1, 5].set(0)
    out2 = jax.block_until_ready(hash_embedding_forward(ids2, shared_emb, imp_w))
    ref2 = hash_embedding_reference(ids2, shared_emb, imp_w)
    np.testing.assert_allclose(np.asarray(out2), np.asarray(ref2),
                               rtol=1e-5, atol=1e-6)

    # Larger case: hits the full MAX_TOKEN_TILE=2048 path with 2 grid steps.
    N3, W3 = 4, 1024
    ids3 = jax.random.randint(k_ids3, (N3, W3), 0, 2_000_000, dtype=jnp.int32)
    ids3 = ids3.at[3, 7].set(0)
    out3 = jax.block_until_ready(hash_embedding_forward(ids3, shared_emb, imp_w))
    ref3 = hash_embedding_reference(ids3, shared_emb, imp_w)
    np.testing.assert_allclose(np.asarray(out3), np.asarray(ref3),
                               rtol=1e-5, atol=1e-6)

    # TODO(synk): only the default combiner='sum' (+ append_weight) path is
    # implemented; 'median' / 'concatenate' combiners are not lowered.
    print("KERNEL_OK")
</pallas_src>

<mosaic_0001>
module attributes {stable_mosaic.version = 11 : i64} {
  func.func @_hash_embedding_kernel(%arg0: i32, %arg1: memref<1x1x128xi32, #tpu.memory_space<vmem>>, %arg2: memref<32x128xf32, #tpu.memory_space<vmem>>, %arg3: memref<4x128xf32, #tpu.memory_space<vmem>>, %arg4: memref<34x128xf32, #tpu.memory_space<vmem>>) attributes {dimension_semantics = [#tpu.dimension_semantics<parallel>], iteration_bounds = array<i64: 1>, scalar_prefetch = 0 : i64, scratch_operands = 0 : i64, tpu.core_type = #tpu.core_type<tc>, window_params = [{transform_indices = @transform_0, window_bounds = array<i64: 1, 1, 128>}, {pipeline_mode = #tpu.pipeline_mode<synchronous>, transform_indices = @transform_1, window_bounds = array<i64: 32, 128>}, {pipeline_mode = #tpu.pipeline_mode<synchronous>, transform_indices = @transform_2, window_bounds = array<i64: 4, 128>}, {transform_indices = @transform_3, window_bounds = array<i64: 34, 128>}]} {
    %c0 = arith.constant 0 : index
    %c0_0 = arith.constant 0 : index
    %c0_1 = arith.constant 0 : index
    %0 = vector.load %arg1[%c0, %c0_0, %c0_1] : memref<1x1x128xi32, #tpu.memory_space<vmem>>, vector<1x1x128xi32>
    %1 = vector.shape_cast %0 : vector<1x1x128xi32> to vector<1x128xi32>
    %2 = tpu.iota {dimensions = array<i32: 0>} : vector<128x128xi32>
    %c255_i32 = arith.constant 255 : i32
    %3 = vector.broadcast %c255_i32 : i32 to vector<1x128xi32>
    %4 = arith.andi %1, %3 : vector<1x128xi32>
    %c127_i32 = arith.constant 127 : i32
    %5 = vector.broadcast %c127_i32 : i32 to vector<1x128xi32>
    %6 = arith.andi %4, %5 : vector<1x128xi32>
    %c7_i32 = arith.constant 7 : i32
    %7 = vector.broadcast %c7_i32 : i32 to vector<1x128xi32>
    %8 = arith.shrsi %4, %7 : vector<1x128xi32>
    %9 = vector.broadcast %6 : vector<1x128xi32> to vector<128x128xi32>
    %10 = arith.cmpi eq, %2, %9 : vector<128x128xi32>
    %11 = arith.extui %10 : vector<128x128xi1> to vector<128x128xi32>
    %12 = arith.sitofp %11 : vector<128x128xi32> to vector<128x128xf32>
    %c0_2 = arith.constant 0 : index
    %c0_3 = arith.constant 0 : index
    %13 = vector.load %arg3[%c0_2, %c0_3] : memref<4x128xf32, #tpu.memory_space<vmem>>, vector<4x128xf32>
    %cst = arith.constant dense<0.000000e+00> : vector<4x128xf32>
    %14 = tpu.matmul %13, %12, %cst {dimension_numbers = #tpu.dot_dimension_numbers<[1], [0], [0], [1], [0, 0, 1, 1], [], []>} : vector<4x128xf32>, vector<128x128xf32>, vector<4x128xf32> -> vector<4x128xf32>
    %c0_i32 = arith.constant 0 : i32
    %15 = vector.broadcast %c0_i32 : i32 to vector<1x128xi32>
    %16 = arith.cmpi sgt, %8, %15 : vector<1x128xi32>
    %17 = vector.extract_strided_slice %14 {offsets = [2, 0], sizes = [2, 128], strides = [1, 1]} : vector<4x128xf32> to vector<2x128xf32>
    %18 = vector.extract_strided_slice %14 {offsets = [0, 0], sizes = [2, 128], strides = [1, 1]} : vector<4x128xf32> to vector<2x128xf32>
    %19 = vector.shape_cast %16 : vector<1x128xi1> to vector<1x128xi1>
    %20 = vector.broadcast %19 : vector<1x128xi1> to vector<2x128xi1>
    %21 = arith.select %20, %17, %18 : vector<2x128xi1>, vector<2x128xf32>
    %c1000003_i32 = arith.constant 1000003 : i32
    %c0_i32_4 = arith.constant 0 : i32
    %22 = arith.cmpi eq, %c1000003_i32, %c0_i32_4 : i32
    %c1_i32 = arith.constant 1 : i32
    %23 = arith.select %22, %c1_i32, %c1000003_i32 : i32
    %24 = vector.broadcast %23 : i32 to vector<1x128xi32>
    %25 = arith.remsi %1, %24 : vector<1x128xi32>
    %c0_i32_5 = arith.constant 0 : i32
    %26 = vector.broadcast %c0_i32_5 : i32 to vector<1x128xi32>
    %27 = arith.cmpi ne, %25, %26 : vector<1x128xi32>
    %c0_i32_6 = arith.constant 0 : i32
    %28 = vector.broadcast %c0_i32_6 : i32 to vector<1x128xi32>
    %29 = arith.cmpi slt, %25, %28 : vector<1x128xi32>
    %c0_i32_7 = arith.constant 0 : i32
    %30 = arith.cmpi slt, %23, %c0_i32_7 : i32
    %31 = vector.broadcast %30 : i1 to vector<1x128xi1>
    %32 = vector.broadcast %31 : vector<1x128xi1> to vector<1x128xi1>
    %33 = arith.xori %29, %32 : vector<1x128xi1>
    %34 = arith.andi %33, %27 : vector<1x128xi1>
    %35 = vector.broadcast %23 : i32 to vector<1x128xi32>
    %36 = arith.addi %25, %35 : vector<1x128xi32>
    %37 = arith.select %34, %36, %25 : vector<1x128xi1>, vector<1x128xi32>
    %c0_i32_8 = arith.constant 0 : i32
    %38 = vector.broadcast %c0_i32_8 : i32 to vector<1x128xi32>
    %39 = arith.cmpi eq, %1, %38 : vector<1x128xi32>
    %c362_i32 = arith.constant 362 : i32
    %40 = vector.broadcast %c362_i32 : i32 to vector<1x128xi32>
    %41 = arith.muli %40, %37 : vector<1x128xi32>
    %c1000003_i32_9 = arith.constant 1000003 : i32
    %c0_i32_10 = arith.constant 0 : i32
    %42 = arith.cmpi eq, %c1000003_i32_9, %c0_i32_10 : i32
    %c1_i32_11 = arith.constant 1 : i32
    %43 = arith.select %42, %c1_i32_11, %c1000003_i32_9 : i32
    %44 = vector.broadcast %43 : i32 to vector<1x128xi32>
    %45 = arith.remsi %41, %44 : vector<1x128xi32>
    %c0_i32_12 = arith.constant 0 : i32
    %46 = vector.broadcast %c0_i32_12 : i32 to vector<1x128xi32>
    %47 = arith.cmpi ne, %45, %46 : vector<1x128xi32>
    %c0_i32_13 = arith.constant 0 : i32
    %48 = vector.broadcast %c0_i32_13 : i32 to vector<1x128xi32>
    %49 = arith.cmpi slt, %45, %48 : vector<1x128xi32>
    %c0_i32_14 = arith.constant 0 : i32
    %50 = arith.cmpi slt, %43, %c0_i32_14 : i32
    %51 = vector.broadcast %50 : i1 to vector<1x128xi1>
    %52 = vector.broadcast %51 : vector<1x128xi1> to vector<1x128xi1>
    %53 = arith.xori %49, %52 : vector<1x128xi1>
    %54 = arith.andi %53, %47 : vector<1x128xi1>
    %55 = vector.broadcast %43 : i32 to vector<1x128xi32>
    %56 = arith.addi %45, %55 : vector<1x128xi32>
    %57 = arith.select %54, %56, %45 : vector<1x128xi1>, vector<1x128xi32>
    %c149_i32 = arith.constant 149 : i32
    %58 = vector.broadcast %c149_i32 : i32 to vector<1x128xi32>
    %59 = arith.muli %58, %37 : vector<1x128xi32>
    %c1000003_i32_15 = arith.constant 1000003 : i32
    %c0_i32_16 = arith.constant 0 : i32
    %60 = arith.cmpi eq, %c1000003_i32_15, %c0_i32_16 : i32
    %c1_i32_17 = arith.constant 1 : i32
    %61 = arith.select %60, %c1_i32_17, %c1000003_i32_15 : i32
    %62 = vector.broadcast %61 : i32 to vector<1x128xi32>
    %63 = arith.remsi %59, %62 : vector<1x128xi32>
    %c0_i32_18 = arith.constant 0 : i32
    %64 = vector.broadcast %c0_i32_18 : i32 to vector<1x128xi32>
    %65 = arith.cmpi ne, %63, %64 : vector<1x128xi32>
    %c0_i32_19 = arith.constant 0 : i32
    %66 = vector.broadcast %c0_i32_19 : i32 to vector<1x128xi32>
    %67 = arith.cmpi slt, %63, %66 : vector<1x128xi32>
    %c0_i32_20 = arith.constant 0 : i32
    %68 = arith.cmpi slt, %61, %c0_i32_20 : i32
    %69 = vector.broadcast %68 : i1 to vector<1x128xi1>
    %70 = vector.broadcast %69 : vector<1x128xi1> to vector<1x128xi1>
    %71 = arith.xori %67, %70 : vector<1x128xi1>
    %72 = arith.andi %71, %65 : vector<1x128xi1>
    %73 = vector.broadcast %61 : i32 to vector<1x128xi32>
    %74 = arith.addi %63, %73 : vector<1x128xi32>
    %75 = arith.select %72, %74, %63 : vector<1x128xi1>, vector<1x128xi32>
    %c256_i32 = arith.constant 256 : i32
    %76 = vector.broadcast %c256_i32 : i32 to vector<1x128xi32>
    %77 = arith.muli %57, %76 : vector<1x128xi32>
    %c1000003_i32_21 = arith.constant 1000003 : i32
    %c0_i32_22 = arith.constant 0 : i32
    %78 = arith.cmpi eq, %c1000003_i32_21, %c0_i32_22 : i32
    %c1_i32_23 = arith.constant 1 : i32
    %79 = arith.select %78, %c1_i32_23, %c1000003_i32_21 : i32
    %80 = vector.broadcast %79 : i32 to vector<1x128xi32>
    %81 = arith.remsi %77, %80 : vector<1x128xi32>
    %c0_i32_24 = arith.constant 0 : i32
    %82 = vector.broadcast %c0_i32_24 : i32 to vector<1x128xi32>
    %83 = arith.cmpi ne, %81, %82 : vector<1x128xi32>
    %c0_i32_25 = arith.constant 0 : i32
    %84 = vector.broadcast %c0_i32_25 : i32 to vector<1x128xi32>
    %85 = arith.cmpi slt, %81, %84 : vector<1x128xi32>
    %c0_i32_26 = arith.constant 0 : i32
    %86 = arith.cmpi slt, %79, %c0_i32_26 : i32
    %87 = vector.broadcast %86 : i1 to vector<1x128xi1>
    %88 = vector.broadcast %87 : vector<1x128xi1> to vector<1x128xi1>
    %89 = arith.xori %85, %88 : vector<1x128xi1>
    %90 = arith.andi %89, %83 : vector<1x128xi1>
    %91 = vector.broadcast %79 : i32 to vector<1x128xi32>
    %92 = arith.addi %81, %91 : vector<1x128xi32>
    %93 = arith.select %90, %92, %81 : vector<1x128xi1>, vector<1x128xi32>
    %94 = arith.addi %93, %75 : vector<1x128xi32>
    %c689_i32 = arith.constant 689 : i32
    %95 = vector.broadcast %c689_i32 : i32 to vector<1x128xi32>
    %96 = arith.addi %94, %95 : vector<1x128xi32>
    %c1000003_i32_27 = arith.constant 1000003 : i32
    %c0_i32_28 = arith.constant 0 : i32
    %97 = arith.cmpi eq, %c1000003_i32_27, %c0_i32_28 : i32
    %c1_i32_29 = arith.constant 1 : i32
    %98 = arith.select %97, %c1_i32_29, %c1000003_i32_27 : i32
    %99 = vector.broadcast %98 : i32 to vector<1x128xi32>
    %100 = arith.remsi %96, %99 : vector<1x128xi32>
    %c0_i32_30 = arith.constant 0 : i32
    %101 = vector.broadcast %c0_i32_30 : i32 to vector<1x128xi32>
    %102 = arith.cmpi ne, %100, %101 : vector<1x128xi32>
    %c0_i32_31 = arith.constant 0 : i32
    %103 = vector.broadcast %c0_i32_31 : i32 to vector<1x128xi32>
    %104 = arith.cmpi slt, %100, %103 : vector<1x128xi32>
    %c0_i32_32 = arith.constant 0 : i32
    %105 = arith.cmpi slt, %98, %c0_i32_32 : i32
    %106 = vector.broadcast %105 : i1 to vector<1x128xi1>
    %107 = vector.broadcast %106 : vector<1x128xi1> to vector<1x128xi1>
    %108 = arith.xori %104, %107 : vector<1x128xi1>
    %109 = arith.andi %108, %102 : vector<1x128xi1>
    %110 = vector.broadcast %98 : i32 to vector<1x128xi32>
    %111 = arith.addi %100, %110 : vector<1x128xi32>
    %112 = arith.select %109, %111, %100 : vector<1x128xi1>, vector<1x128xi32>
    %c127_i32_33 = arith.constant 127 : i32
    %113 = vector.broadcast %c127_i32_33 : i32 to vector<1x128xi32>
    %114 = arith.andi %112, %113 : vector<1x128xi32>
    %c7_i32_34 = arith.constant 7 : i32
    %115 = vector.broadcast %c7_i32_34 : i32 to vector<1x128xi32>
    %116 = arith.shrsi %112, %115 : vector<1x128xi32>
    %c127_i32_35 = arith.constant 127 : i32
    %117 = vector.broadcast %c127_i32_35 : i32 to vector<1x128xi32>
    %118 = arith.andi %116, %117 : vector<1x128xi32>
    %119 = arith.addi %114, %118 : vector<1x128xi32>
    %c14_i32 = arith.constant 14 : i32
    %120 = vector.broadcast %c14_i32 : i32 to vector<1x128xi32>
    %121 = arith.shrsi %112, %120 : vector<1x128xi32>
    %122 = arith.addi %119, %121 : vector<1x128xi32>
    %c127_i32_36 = arith.constant 127 : i32
    %123 = vector.broadcast %c127_i32_36 : i32 to vector<1x128xi32>
    %124 = arith.andi %122, %123 : vector<1x128xi32>
    %c7_i32_37 = arith.constant 7 : i32
    %125 = vector.broadcast %c7_i32_37 : i32 to vector<1x128xi32>
    %126 = arith.shrsi %122, %125 : vector<1x128xi32>
    %127 = arith.addi %124, %126 : vector<1x128xi32>
    %c127_i32_38 = arith.constant 127 : i32
    %128 = vector.broadcast %c127_i32_38 : i32 to vector<1x128xi32>
    %129 = arith.cmpi sge, %127, %128 : vector<1x128xi32>
    %c127_i32_39 = arith.constant 127 : i32
    %130 = vector.broadcast %c127_i32_39 : i32 to vector<1x128xi32>
    %131 = arith.subi %127, %130 : vector<1x128xi32>
    %132 = arith.select %129, %131, %127 : vector<1x128xi1>, vector<1x128xi32>
    %c0_i32_40 = arith.constant 0 : i32
    %133 = vector.broadcast %c0_i32_40 : i32 to vector<1x128xi32>
    %134 = arith.select %39, %133, %132 : vector<1x128xi1>, vector<1x128xi32>
    %135 = vector.broadcast %134 : vector<1x128xi32> to vector<128x128xi32>
    %136 = arith.cmpi eq, %2, %135 : vector<128x128xi32>
    %137 = arith.extui %136 : vector<128x128xi1> to vector<128x128xi32>
    %138 = arith.sitofp %137 : vector<128x128xi32> to vector<128x128xf32>
    %c0_41 = arith.constant 0 : index
    %c0_42 = arith.constant 0 : index
    %139 = vector.load %arg2[%c0_41, %c0_42] : memref<32x128xf32, #tpu.memory_space<vmem>>, vector<32x128xf32>
    %cst_43 = arith.constant dense<0.000000e+00> : vector<32x128xf32>
    %140 = tpu.matmul %139, %138, %cst_43 {dimension_numbers = #tpu.dot_dimension_numbers<[1], [0], [0], [1], [0, 0, 1, 1], [], []>} : vector<32x128xf32>, vector<128x128xf32>, vector<32x128xf32> -> vector<32x128xf32>
    %141 = vector.extract_strided_slice %21 {offsets = [0, 0], sizes = [1, 128], strides = [1, 1]} : vector<2x128xf32> to vector<1x128xf32>
    %142 = vector.broadcast %141 : vector<1x128xf32> to vector<32x128xf32>
    %143 = arith.mulf %140, %142 : vector<32x128xf32>
    %c212_i32 = arith.constant 212 : i32
    %144 = vector.broadcast %c212_i32 : i32 to vector<1x128xi32>
    %145 = arith.muli %144, %37 : vector<1x128xi32>
    %c1000003_i32_44 = arith.constant 1000003 : i32
    %c0_i32_45 = arith.constant 0 : i32
    %146 = arith.cmpi eq, %c1000003_i32_44, %c0_i32_45 : i32
    %c1_i32_46 = arith.constant 1 : i32
    %147 = arith.select %146, %c1_i32_46, %c1000003_i32_44 : i32
    %148 = vector.broadcast %147 : i32 to vector<1x128xi32>
    %149 = arith.remsi %145, %148 : vector<1x128xi32>
    %c0_i32_47 = arith.constant 0 : i32
    %150 = vector.broadcast %c0_i32_47 : i32 to vector<1x128xi32>
    %151 = arith.cmpi ne, %149, %150 : vector<1x128xi32>
    %c0_i32_48 = arith.constant 0 : i32
    %152 = vector.broadcast %c0_i32_48 : i32 to vector<1x128xi32>
    %153 = arith.cmpi slt, %149, %152 : vector<1x128xi32>
    %c0_i32_49 = arith.constant 0 : i32
    %154 = arith.cmpi slt, %147, %c0_i32_49 : i32
    %155 = vector.broadcast %154 : i1 to vector<1x128xi1>
    %156 = vector.broadcast %155 : vector<1x128xi1> to vector<1x128xi1>
    %157 = arith.xori %153, %156 : vector<1x128xi1>
    %158 = arith.andi %157, %151 : vector<1x128xi1>
    %159 = vector.broadcast %147 : i32 to vector<1x128xi32>
    %160 = arith.addi %149, %159 : vector<1x128xi32>
    %161 = arith.select %158, %160, %149 : vector<1x128xi1>, vector<1x128xi32>
    %c51_i32 = arith.constant 51 : i32
    %162 = vector.broadcast %c51_i32 : i32 to vector<1x128xi32>
    %163 = arith.muli %162, %37 : vector<1x128xi32>
    %c1000003_i32_50 = arith.constant 1000003 : i32
    %c0_i32_51 = arith.constant 0 : i32
    %164 = arith.cmpi eq, %c1000003_i32_50, %c0_i32_51 : i32
    %c1_i32_52 = arith.constant 1 : i32
    %165 = arith.select %164, %c1_i32_52, %c1000003_i32_50 : i32
    %166 = vector.broadcast %165 : i32 to vector<1x128xi32>
    %167 = arith.remsi %163, %166 : vector<1x128xi32>
    %c0_i32_53 = arith.constant 0 : i32
    %168 = vector.broadcast %c0_i32_53 : i32 to vector<1x128xi32>
    %169 = arith.cmpi ne, %167, %168 : vector<1x128xi32>
    %c0_i32_54 = arith.constant 0 : i32
    %170 = vector.broadcast %c0_i32_54 : i32 to vector<1x128xi32>
    %171 = arith.cmpi slt, %167, %170 : vector<1x128xi32>
    %c0_i32_55 = arith.constant 0 : i32
    %172 = arith.cmpi slt, %165, %c0_i32_55 : i32
    %173 = vector.broadcast %172 : i1 to vector<1x128xi1>
    %174 = vector.broadcast %173 : vector<1x128xi1> to vector<1x128xi1>
    %175 = arith.xori %171, %174 : vector<1x128xi1>
    %176 = arith.andi %175, %169 : vector<1x128xi1>
    %177 = vector.broadcast %165 : i32 to vector<1x128xi32>
    %178 = arith.addi %167, %177 : vector<1x128xi32>
    %179 = arith.select %176, %178, %167 : vector<1x128xi1>, vector<1x128xi32>
    %c256_i32_56 = arith.constant 256 : i32
    %180 = vector.broadcast %c256_i32_56 : i32 to vector<1x128xi32>
    %181 = arith.muli %161, %180 : vector<1x128xi32>
    %c1000003_i32_57 = arith.constant 1000003 : i32
    %c0_i32_58 = arith.constant 0 : i32
    %182 = arith.cmpi eq, %c1000003_i32_57, %c0_i32_58 : i32
    %c1_i32_59 = arith.constant 1 : i32
    %183 = arith.select %182, %c1_i32_59, %c1000003_i32_57 : i32
    %184 = vector.broadcast %183 : i32 to vector<1x128xi32>
    %185 = arith.remsi %181, %184 : vector<1x128xi32>
    %c0_i32_60 = arith.constant 0 : i32
    %186 = vector.broadcast %c0_i32_60 : i32 to vector<1x128xi32>
    %187 = arith.cmpi ne, %185, %186 : vector<1x128xi32>
    %c0_i32_61 = arith.constant 0 : i32
    %188 = vector.broadcast %c0_i32_61 : i32 to vector<1x128xi32>
    %189 = arith.cmpi slt, %185, %188 : vector<1x128xi32>
    %c0_i32_62 = arith.constant 0 : i32
    %190 = arith.cmpi slt, %183, %c0_i32_62 : i32
    %191 = vector.broadcast %190 : i1 to vector<1x128xi1>
    %192 = vector.broadcast %191 : vector<1x128xi1> to vector<1x128xi1>
    %193 = arith.xori %189, %192 : vector<1x128xi1>
    %194 = arith.andi %193, %187 : vector<1x128xi1>
    %195 = vector.broadcast %183 : i32 to vector<1x128xi32>
    %196 = arith.addi %185, %195 : vector<1x128xi32>
    %197 = arith.select %194, %196, %185 : vector<1x128xi1>, vector<1x128xi32>
    %198 = arith.addi %197, %179 : vector<1x128xi32>
    %c12345_i32 = arith.constant 12345 : i32
    %199 = vector.broadcast %c12345_i32 : i32 to vector<1x128xi32>
    %200 = arith.addi %198, %199 : vector<1x128xi32>
    %c1000003_i32_63 = arith.constant 1000003 : i32
    %c0_i32_64 = arith.constant 0 : i32
    %201 = arith.cmpi eq, %c1000003_i32_63, %c0_i32_64 : i32
    %c1_i32_65 = arith.constant 1 : i32
    %202 = arith.select %201, %c1_i32_65, %c1000003_i32_63 : i32
    %203 = vector.broadcast %202 : i32 to vector<1x128xi32>
    %204 = arith.remsi %200, %203 : vector<1x128xi32>
    %c0_i32_66 = arith.constant 0 : i32
    %205 = vector.broadcast %c0_i32_66 : i32 to vector<1x128xi32>
    %206 = arith.cmpi ne, %204, %205 : vector<1x128xi32>
    %c0_i32_67 = arith.constant 0 : i32
    %207 = vector.broadcast %c0_i32_67 : i32 to vector<1x128xi32>
    %208 = arith.cmpi slt, %204, %207 : vector<1x128xi32>
    %c0_i32_68 = arith.constant 0 : i32
    %209 = arith.cmpi slt, %202, %c0_i32_68 : i32
    %210 = vector.broadcast %209 : i1 to vector<1x128xi1>
    %211 = vector.broadcast %210 : vector<1x128xi1> to vector<1x128xi1>
    %212 = arith.xori %208, %211 : vector<1x128xi1>
    %213 = arith.andi %212, %206 : vector<1x128xi1>
    %214 = vector.broadcast %202 : i32 to vector<1x128xi32>
    %215 = arith.addi %204, %214 : vector<1x128xi32>
    %216 = arith.select %213, %215, %204 : vector<1x128xi1>, vector<1x128xi32>
    %c127_i32_69 = arith.constant 127 : i32
    %217 = vector.broadcast %c127_i32_69 : i32 to vector<1x128xi32>
    %218 = arith.andi %216, %217 : vector<1x128xi32>
    %c7_i32_70 = arith.constant 7 : i32
    %219 = vector.broadcast %c7_i32_70 : i32 to vector<1x128xi32>
    %220 = arith.shrsi %216, %219 : vector<1x128xi32>
    %c127_i32_71 = arith.constant 127 : i32
    %221 = vector.broadcast %c127_i32_71 : i32 to vector<1x128xi32>
    %222 = arith.andi %220, %221 : vector<1x128xi32>
    %223 = arith.addi %218, %222 : vector<1x128xi32>
    %c14_i32_72 = arith.constant 14 : i32
    %224 = vector.broadcast %c14_i32_72 : i32 to vector<1x128xi32>
    %225 = arith.shrsi %216, %224 : vector<1x128xi32>
    %226 = arith.addi %223, %225 : vector<1x128xi32>
    %c127_i32_73 = arith.constant 127 : i32
    %227 = vector.broadcast %c127_i32_73 : i32 to vector<1x128xi32>
    %228 = arith.andi %226, %227 : vector<1x128xi32>
    %c7_i32_74 = arith.constant 7 : i32
    %229 = vector.broadcast %c7_i32_74 : i32 to vector<1x128xi32>
    %230 = arith.shrsi %226, %229 : vector<1x128xi32>
    %231 = arith.addi %228, %230 : vector<1x128xi32>
    %c127_i32_75 = arith.constant 127 : i32
    %232 = vector.broadcast %c127_i32_75 : i32 to vector<1x128xi32>
    %233 = arith.cmpi sge, %231, %232 : vector<1x128xi32>
    %c127_i32_76 = arith.constant 127 : i32
    %234 = vector.broadcast %c127_i32_76 : i32 to vector<1x128xi32>
    %235 = arith.subi %231, %234 : vector<1x128xi32>
    %236 = arith.select %233, %235, %231 : vector<1x128xi1>, vector<1x128xi32>
    %c0_i32_77 = arith.constant 0 : i32
    %237 = vector.broadcast %c0_i32_77 : i32 to vector<1x128xi32>
    %238 = arith.select %39, %237, %236 : vector<1x128xi1>, vector<1x128xi32>
    %239 = vector.broadcast %238 : vector<1x128xi32> to vector<128x128xi32>
    %240 = arith.cmpi eq, %2, %239 : vector<128x128xi32>
    %241 = arith.extui %240 : vector<128x128xi1> to vector<128x128xi32>
    %242 = arith.sitofp %241 : vector<128x128xi32> to vector<128x128xf32>
    %c0_78 = arith.constant 0 : index
    %c0_79 = arith.constant 0 : index
    %243 = vector.load %arg2[%c0_78, %c0_79] : memref<32x128xf32, #tpu.memory_space<vmem>>, vector<32x128xf32>
    %cst_80 = arith.constant dense<0.000000e+00> : vector<32x128xf32>
    %244 = tpu.matmul %243, %242, %cst_80 {dimension_numbers = #tpu.dot_dimension_numbers<[1], [0], [0], [1], [0, 0, 1, 1], [], []>} : vector<32x128xf32>, vector<128x128xf32>, vector<32x128xf32> -> vector<32x128xf32>
    %245 = vector.extract_strided_slice %21 {offsets = [1, 0], sizes = [1, 128], strides = [1, 1]} : vector<2x128xf32> to vector<1x128xf32>
    %246 = vector.broadcast %245 : vector<1x128xf32> to vector<32x128xf32>
    %247 = arith.mulf %244, %246 : vector<32x128xf32>
    %248 = arith.addf %143, %247 : vector<32x128xf32>
    %c0_81 = arith.constant 0 : index
    %c0_82 = arith.constant 0 : index
    %249 = vector.load %arg4[%c0_81, %c0_82] : memref<34x128xf32, #tpu.memory_space<vmem>>, vector<32x128xf32>
    tpu.vector_store %arg4[%c0_81, %c0_82], %248 {strides = array<i32>} : memref<34x128xf32, #tpu.memory_space<vmem>>, vector<32x128xf32>,
    %c32 = arith.constant 32 : index
    %c0_83 = arith.constant 0 : index
    %250 = vector.load %arg4[%c32, %c0_83] : memref<34x128xf32, #tpu.memory_space<vmem>>, vector<2x128xf32>
    tpu.vector_store %arg4[%c32, %c0_83], %21 {strides = array<i32>} : memref<34x128xf32, #tpu.memory_space<vmem>>, vector<2x128xf32>,
    return
  }
  func.func @transform_0(%arg0: i32) -> (i32, i32, i32) {
    %c0_i32 = arith.constant 0 : i32
    %c0_i32_0 = arith.constant 0 : i32
    %c0_i32_1 = arith.constant 0 : i32
    return %arg0, %c0_i32, %c0_i32_0 : i32, i32, i32
  }
  func.func @transform_1(%arg0: i32) -> (i32, i32) {
    %c0_i32 = arith.constant 0 : i32
    %c0_i32_0 = arith.constant 0 : i32
    %c0_i32_1 = arith.constant 0 : i32
    return %c0_i32, %c0_i32_0 : i32, i32
  }
  func.func @transform_2(%arg0: i32) -> (i32, i32) {
    %c0_i32 = arith.constant 0 : i32
    %c0_i32_0 = arith.constant 0 : i32
    %c0_i32_1 = arith.constant 0 : i32
    return %c0_i32, %c0_i32_0 : i32, i32
  }
  func.func @transform_3(%arg0: i32) -> (i32, i32) {
    %c0_i32 = arith.constant 0 : i32
    %c0_i32_0 = arith.constant 0 : i32
    return %c0_i32, %arg0 : i32, i32
  }
}

</mosaic_0001>

<llo_original>
// kernel: tpu_custom_call.1
$region0: #{tpu_custom_call.1}
  #allocation0 [shape = 'u32[]', space=smem, size = 0x4, offset = 0x4, fixed_abs, tag = 'smem constant byte address 0x4 - core index']
  #allocation1 [shape = 'u32[144,128]{1,0:T(1,128)}', space=vmem, size = 0x12000, scoped, tag = 'internal scratch']
  %s0 = inlined_call_operand.hbm [shape: s32[1,1,128], index: 0, kind: input, shape index: {}]
  %s1 = inlined_call_operand.hbm [shape: f32[32,128], index: 1, kind: input, shape index: {}]
  %s2 = inlined_call_operand.hbm [shape: f32[4,128], index: 2, kind: input, shape index: {}]
  %s3 = inlined_call_operand.hbm [shape: f32[34,128], index: 3, kind: output, shape index: {}]
  %s4 = sld [smem:[#allocation0]]
  $region34: #{tpu_custom_call.1} parent=0
    _
  %s6 = ssub.s32 1, %s4
  %s7 = scalar_select 0, %s6, %s4
  $region1: #{tpu_custom_call.1} parent=0
    #allocation2 [shape = 'u8[512]{0}', space=vmem, size = 0x400, scoped, tag = 'input window, operand 0, single buffered']
    #allocation3 [shape = 's32[1]{0}', space=sflag, size = 0x4, scoped, tag = 'scoped memory for tpu_custom_call.1']
    #allocation4 [shape = 's32[1]{0}', space=sflag, size = 0x4, scoped, tag = 'scoped memory for tpu_custom_call.1']
    #allocation5 [shape = 'u8[16384]{0}', space=vmem, size = 0x4000, scoped, tag = 'input window, operand 1, single buffered']
    #allocation6 [shape = 's32[1]{0}', space=sflag, size = 0x4, scoped, tag = 'scoped memory for tpu_custom_call.1']
    #allocation7 [shape = 'u8[2048]{0}', space=vmem, size = 0x800, scoped, tag = 'input window, operand 2, single buffered']
    #allocation8 [shape = 'u8[20480]{0}', space=vmem, size = 0x5000, scoped, tag = 'output window, operand 0, single buffered']
    %8 = vsyncpa [#allocation3], 0
    %9 = vsyncpa [#allocation6], 0
    %10 = vsyncpa [#allocation4], 0
    // Predicated region
    $region2: #{tpu_custom_call.1} parent=1 // pred_check
      _
    $region3: #{tpu_custom_call.1} parent=1 // pred_check_branch
      %12 = sbr.rel (0) target = $region5
    $region4: #{tpu_custom_call.1} parent=1 // pred_region
      %s14 = ssub.s32 16, 16
      %15 = vsyncadd [#allocation3], %s14
      %s17 = sshll.u32 [#allocation2], 4
      %s18 = int_to_ptr.vmem [resolvable:$true] %s17
      %20 = dma.hbm_to_vmem [thread:$0]  %s0, 16, %s18, [#allocation3]
    $region5: #{tpu_custom_call.1} parent=1 // pred_fallthru
      _
    // Predicated region
    $region6: #{tpu_custom_call.1} parent=1 // pred_check
      _
    $region7: #{tpu_custom_call.1} parent=1 // pred_check_branch
      %22 = sbr.rel (0) target = $region9
    $region8: #{tpu_custom_call.1} parent=1 // pred_region
      %s24 = ssub.s32 512, 512
      %25 = vsyncadd [#allocation6], %s24
      %s26 = sshll.u32 [#allocation5], 4
      %s27 = int_to_ptr.vmem [resolvable:$true] %s26
      %32 = dma.hbm_to_vmem [thread:$0]  %s1, 512, %s27, [#allocation6], 128, 128, 8
    $region9: #{tpu_custom_call.1} parent=1 // pred_fallthru
      _
    // Predicated region
    $region10: #{tpu_custom_call.1} parent=1 // pred_check
      _
    $region11: #{tpu_custom_call.1} parent=1 // pred_check_branch
      %34 = sbr.rel (0) target = $region13
    $region12: #{tpu_custom_call.1} parent=1 // pred_region
      %s36 = ssub.s32 64, 64
      %37 = vsyncadd [#allocation6], %s36
      %s39 = sshll.u32 [#allocation7], 4
      %s40 = int_to_ptr.vmem [resolvable:$true] %s39
      %42 = dma.hbm_to_vmem [thread:$0]  %s2, 64, %s40, [#allocation6]
    $region13: #{tpu_custom_call.1} parent=1 // pred_fallthru
      _
    // Predicated region
    $region14: #{tpu_custom_call.1} parent=1 // pred_check
      _
    $region15: #{tpu_custom_call.1} parent=1 // pred_check_branch
      %44 = sbr.rel (0) target = $region17
    $region16: #{tpu_custom_call.1} parent=1 // pred_region
      %45 = dma.done [#allocation3], 16
    $region17: #{tpu_custom_call.1} parent=1 // pred_fallthru
      _
    // Predicated region
    $region18: #{tpu_custom_call.1} parent=1 // pred_check
      _
    $region19: #{tpu_custom_call.1} parent=1 // pred_check_branch
      %47 = sbr.rel (0) target = $region21
    $region20: #{tpu_custom_call.1} parent=1 // pred_region
      %48 = dma.done [#allocation6], 512
    $region21: #{tpu_custom_call.1} parent=1 // pred_fallthru
      _
    // Predicated region
    $region22: #{tpu_custom_call.1} parent=1 // pred_check
      _
    $region23: #{tpu_custom_call.1} parent=1 // pred_check_branch
      %50 = sbr.rel (0) target = $region25
    $region24: #{tpu_custom_call.1} parent=1 // pred_region
      %51 = dma.done [#allocation6], 64
    $region25: #{tpu_custom_call.1} parent=1 // pred_fallthru
      _
    %v52 = vld [vmem:[#allocation2] sm:$0x1]
    %v53 = vlaneseq
    %v54 = vshrl.u32 %v53, 7
    %v55 = vadd.s32 %v54, 8
    %v56 = vadd.s32 %v54, 16
    %v57 = vadd.s32 %v54, 24
    %v58 = vadd.s32 %v54, 32
    %v59 = vadd.s32 %v54, 40
    %v60 = vadd.s32 %v54, 48
    %v61 = vadd.s32 %v54, 56
    %v62 = vadd.s32 %v54, 64
    %v63 = vadd.s32 %v54, 72
    %v64 = vadd.s32 %v54, 80
    %v65 = vadd.s32 %v54, 88
    %v66 = vadd.s32 %v54, 96
    %v67 = vadd.s32 %v54, 104
    %v68 = vadd.s32 %v54, 112
    %v69 = vadd.s32 %v54, 120
    %v70 = vand.u32 %v52, 255
    %v71 = vand.u32 %v70, 127
    %v72 = vshra.s32 %v70, 7
    %v73 = vlaneseq
    %v74 = vshrl.u32 %v73, 7
    %v75 = vsub.s32 0, %v74
    %v76 = vrot.slane %v71, %v75
    %vm77 = vcmp.eq.s32.totalorder %v54, %v76
    %vm78 = vcmp.eq.s32.totalorder %v55, %v76
    %vm79 = vcmp.eq.s32.totalorder %v56, %v76
    %vm80 = vcmp.eq.s32.totalorder %v57, %v76
    %vm81 = vcmp.eq.s32.totalorder %v58, %v76
    %vm82 = vcmp.eq.s32.totalorder %v59, %v76
    %vm83 = vcmp.eq.s32.totalorder %v60, %v76
    %vm84 = vcmp.eq.s32.totalorder %v61, %v76
    %vm85 = vcmp.eq.s32.totalorder %v62, %v76
    %vm86 = vcmp.eq.s32.totalorder %v63, %v76
    %vm87 = vcmp.eq.s32.totalorder %v64, %v76
    %vm88 = vcmp.eq.s32.totalorder %v65, %v76
    %vm89 = vcmp.eq.s32.totalorder %v66, %v76
    %vm90 = vcmp.eq.s32.totalorder %v67, %v76
    %vm91 = vcmp.eq.s32.totalorder %v68, %v76
    %vm92 = vcmp.eq.s32.totalorder %v69, %v76
    %v93 = vsel %vm77, 1, 0
    %v94 = vsel %vm78, 1, 0
    %v95 = vsel %vm79, 1, 0
    %v96 = vsel %vm80, 1, 0
    %v97 = vsel %vm81, 1, 0
    %v98 = vsel %vm82, 1, 0
    %v99 = vsel %vm83, 1, 0
    %v100 = vsel %vm84, 1, 0
    %v101 = vsel %vm85, 1, 0
    %v102 = vsel %vm86, 1, 0
    %v103 = vsel %vm87, 1, 0
    %v104 = vsel %vm88, 1, 0
    %v105 = vsel %vm89, 1, 0
    %v106 = vsel %vm90, 1, 0
    %v107 = vsel %vm91, 1, 0
    %v108 = vsel %vm92, 1, 0
    %v109 = vcvt.s32.f32 %v93
    %v110 = vcvt.s32.f32 %v94
    %v111 = vcvt.s32.f32 %v95
    %v112 = vcvt.s32.f32 %v96
    %v113 = vcvt.s32.f32 %v97
    %v114 = vcvt.s32.f32 %v98
    %v115 = vcvt.s32.f32 %v99
    %v116 = vcvt.s32.f32 %v100
    %v117 = vcvt.s32.f32 %v101
    %v118 = vcvt.s32.f32 %v102
    %v119 = vcvt.s32.f32 %v103
    %v120 = vcvt.s32.f32 %v104
    %v121 = vcvt.s32.f32 %v105
    %v122 = vcvt.s32.f32 %v106
    %v123 = vcvt.s32.f32 %v107
    %v124 = vcvt.s32.f32 %v108
    %v125 = vld [vmem:[#allocation7] sm:$0xf]
    %126 = vmatprep.subr.mxu0 0.0
    %127 = vmatpush1.msra.mxu0 %v124
    %128 = vmatprep.subr.mxu0 0.0
    %129 = vmatpush1.msra.mxu0 %v123
    %130 = vmatprep.subr.mxu0 0.0
    %131 = vmatpush1.msra.mxu0 %v122
    %132 = vmatprep.subr.mxu0 0.0
    %133 = vmatpush1.msra.mxu0 %v121
    %134 = vmatprep.subr.mxu0 0.0
    %135 = vmatpush1.msra.mxu0 %v120
    %136 = vmatprep.subr.mxu0 0.0
    %137 = vmatpush1.msra.mxu0 %v119
    %138 = vmatprep.subr.mxu0 0.0
    %139 = vmatpush1.msra.mxu0 %v118
    %140 = vmatprep.subr.mxu0 0.0
    %141 = vmatpush1.msra.mxu0 %v117
    %142 = vmatprep.subr.mxu0 0.0
    %143 = vmatpush1.msra.mxu0 %v116
    %144 = vmatprep.subr.mxu0 0.0
    %145 = vmatpush1.msra.mxu0 %v115
    %146 = vmatprep.subr.mxu0 0.0
    %147 = vmatpush1.msra.mxu0 %v114
    %148 = vmatprep.subr.mxu0 0.0
    %149 = vmatpush1.msra.mxu0 %v113
    %150 = vmatprep.subr.mxu0 0.0
    %151 = vmatpush1.msra.mxu0 %v112
    %152 = vmatprep.subr.mxu0 0.0
    %153 = vmatpush1.msra.mxu0 %v111
    %154 = vmatprep.subr.mxu0 0.0
    %155 = vmatpush1.msra.mxu0 %v110
    %156 = vmatprep.subr.mxu0 0.0
    %157 = vmatpush1.msra.mxu0 %v109
    %158 = vmatprep.subr.mxu0 0.0
    %159 = vmatpush2.msra.mxu0 0.0
    %160 = vmatprep.subr.mxu0 0.0
    %161 = vmatpush2.msra.mxu0 0.0
    %162 = vmatprep.subr.mxu0 0.0
    %163 = vmatpush2.msra.mxu0 0.0
    %164 = vmatprep.subr.mxu0 0.0
    %165 = vmatpush2.msra.mxu0 0.0
    %166 = vmatprep.subr.mxu0 0.0
    %167 = vmatpush2.msra.mxu0 0.0
    %168 = vmatprep.subr.mxu0 0.0
    %169 = vmatpush2.msra.mxu0 0.0
    %170 = vmatprep.subr.mxu0 0.0
    %171 = vmatpush2.msra.mxu0 0.0
    %172 = vmatprep.subr.mxu0 0.0
    %173 = vmatpush2.msra.mxu0 0.0
    %174 = vmatprep.subr.mxu0 0.0
    %175 = vmatpush2.msra.mxu0 0.0
    %176 = vmatprep.subr.mxu0 0.0
    %177 = vmatpush2.msra.mxu0 0.0
    %178 = vmatprep.subr.mxu0 0.0
    %179 = vmatpush2.msra.mxu0 0.0
    %180 = vmatprep.subr.mxu0 0.0
    %181 = vmatpush2.msra.mxu0 0.0
    %182 = vmatprep.subr.mxu0 0.0
    %183 = vmatpush2.msra.mxu0 0.0
    %184 = vmatprep.subr.mxu0 0.0
    %185 = vmatpush2.msra.mxu0 0.0
    %186 = vmatprep.subr.mxu0 0.0
    %187 = vmatpush2.msra.mxu0 0.0
    %188 = vmatprep.subr.mxu0 0.0
    %189 = vmatpush2.msra.mxu0 0.0
    %190 = vmatprep.mubr.f32.mxu0 0.0
    %191 = vmatmul.mubr.f32.gmra.mxu0 %v125
    %v192 = vpop.f32.mrf.mxu0
    %v193 = vadd.f32 0.0, %v192
    %v194 = vpop.f32.mrf.mxu0
    %195 = vdwg.mxu0
    %vm196 = vcmp.gt.s32.totalorder %v72, 0
    %v197 = vsel %vm196, 1, 0
    %v198 = vlaneseq
    %v199 = vshrl.u32 %v198, 7
    %v200 = vsub.s32 0, %v199
    %v201 = vrot.slane %v197, %v200
    %vm202 = vcmp.eq.s32.totalorder %v201, 1
    %v204 = vrot.slane %v193, 6
    %v206 = vsel %vm202, %v193, %v204
    %vm207 = vcmp.lt.s32.totalorder %v52, 0
    %v208 = vsub.s32 0, %v52
    %v209 = vsel %vm207, %v208, %v52
    %v210 = vmul.u32.u64.compose %v209, 2251793058
    %v211 = vextract.low.u32 %v210
    %v212 = vextract.high.u32 %v210
    %vm213 = vc.u32 %v211, 2251793058
    %v214 = vsel %vm213, 1, 0
    %v215 = vadd.s32 %v212, %v214
    %v216 = vshrl.u32 %v215, 19
    %v217 = vmul.u32 %v216, 1000003
    %v218 = vsub.s32 %v209, %v217
    %v219 = vsub.s32 0, %v218
    %v220 = vsel %vm207, %v219, %v218
    %vm221 = vcmp.ne.s32.totalorder %v220, 0
    %vm222 = vcmp.lt.s32.totalorder %v220, 0
    %vm223 = vmand %vm222, %vm221
    %v224 = vadd.s32 %v220, 1000003
    %v225 = vsel %vm223, %v224, %v220
    %vm226 = vcmp.eq.s32.totalorder %v52, 0
    %v227 = vmul.u32 %v225, 362
    %vm228 = vcmp.lt.s32.totalorder %v227, 0
    %v229 = vsub.s32 0, %v227
    %v230 = vsel %vm228, %v229, %v227
    %v231 = vmul.u32.u64.compose %v230, 2251793058
    %v232 = vextract.low.u32 %v231
    %v233 = vextract.high.u32 %v231
    %vm234 = vc.u32 %v232, 2251793058
    %v235 = vsel %vm234, 1, 0
    %v236 = vadd.s32 %v233, %v235
    %v237 = vshrl.u32 %v236, 19
    %v238 = vmul.u32 %v237, 1000003
    %v239 = vsub.s32 %v230, %v238
    %v240 = vsub.s32 0, %v239
    %v241 = vsel %vm228, %v240, %v239
    %vm242 = vcmp.ne.s32.totalorder %v241, 0
    %vm243 = vcmp.lt.s32.totalorder %v241, 0
    %vm244 = vmand %vm243, %vm242
    %v245 = vadd.s32 %v241, 1000003
    %v246 = vsel %vm244, %v245, %v241
    %v247 = vmul.u32 %v225, 149
    %vm248 = vcmp.lt.s32.totalorder %v247, 0
    %v249 = vsub.s32 0, %v247
    %v250 = vsel %vm248, %v249, %v247
    %v251 = vmul.u32.u64.compose %v250, 2251793058
    %v252 = vextract.low.u32 %v251
    %v253 = vextract.high.u32 %v251
    %vm254 = vc.u32 %v252, 2251793058
    %v255 = vsel %vm254, 1, 0
    %v256 = vadd.s32 %v253, %v255
    %v257 = vshrl.u32 %v256, 19
    %v258 = vmul.u32 %v257, 1000003
    %v259 = vsub.s32 %v250, %v258
    %v260 = vsub.s32 0, %v259
    %v261 = vsel %vm248, %v260, %v259
    %vm262 = vcmp.ne.s32.totalorder %v261, 0
    %vm263 = vcmp.lt.s32.totalorder %v261, 0
    %vm264 = vmand %vm263, %vm262
    %v265 = vadd.s32 %v261, 1000003
    %v266 = vsel %vm264, %v265, %v261
    %v267 = vmul.u32 %v246, 256
    %vm268 = vcmp.lt.s32.totalorder %v267, 0
    %v269 = vsub.s32 0, %v267
    %v270 = vsel %vm268, %v269, %v267
    %v271 = vmul.u32.u64.compose %v270, 2251793058
    %v272 = vextract.low.u32 %v271
    %v273 = vextract.high.u32 %v271
    %vm274 = vc.u32 %v272, 2251793058
    %v275 = vsel %vm274, 1, 0
    %v276 = vadd.s32 %v273, %v275
    %v277 = vshrl.u32 %v276, 19
    %v278 = vmul.u32 %v277, 1000003
    %v279 = vsub.s32 %v270, %v278
    %v280 = vsub.s32 0, %v279
    %v281 = vsel %vm268, %v280, %v279
    %vm282 = vcmp.ne.s32.totalorder %v281, 0
    %vm283 = vcmp.lt.s32.totalorder %v281, 0
    %vm284 = vmand %vm283, %vm282
    %v285 = vadd.s32 %v281, 1000003
    %v286 = vsel %vm284, %v285, %v281
    %v287 = vadd.s32 %v286, %v266
    %v288 = vadd.s32 %v287, 689
    %vm289 = vcmp.lt.s32.totalorder %v288, 0
    %v290 = vsub.s32 0, %v288
    %v291 = vsel %vm289, %v290, %v288
    %v292 = vmul.u32.u64.compose %v291, 2251793058
    %v293 = vextract.low.u32 %v292
    %v294 = vextract.high.u32 %v292
    %vm295 = vc.u32 %v293, 2251793058
    %v296 = vsel %vm295, 1, 0
    %v297 = vadd.s32 %v294, %v296
    %v298 = vshrl.u32 %v297, 19
    %v299 = vmul.u32 %v298, 1000003
    %v300 = vsub.s32 %v291, %v299
    %v301 = vsub.s32 0, %v300
    %v302 = vsel %vm289, %v301, %v300
    %vm303 = vcmp.ne.s32.totalorder %v302, 0
    %vm304 = vcmp.lt.s32.totalorder %v302, 0
    %vm305 = vmand %vm304, %vm303
    %v306 = vadd.s32 %v302, 1000003
    %v307 = vsel %vm305, %v306, %v302
    %v308 = vand.u32 %v307, 127
    %v309 = vshra.s32 %v307, 7
    %v310 = vand.u32 %v309, 127
    %v311 = vadd.s32 %v308, %v310
    %v312 = vshra.s32 %v307, 14
    %v313 = vadd.s32 %v311, %v312
    %v314 = vand.u32 %v313, 127
    %v315 = vshra.s32 %v313, 7
    %v316 = vadd.s32 %v314, %v315
    %vm317 = vcmp.ge.s32.totalorder %v316, 127
    %v318 = vsub.s32 %v316, 127
    %v319 = vsel %vm317, %v318, %v316
    %v320 = vsel %vm226, 0, %v319
    %v321 = vlaneseq
    %v322 = vshrl.u32 %v321, 7
    %v323 = vsub.s32 0, %v322
    %v324 = vrot.slane %v320, %v323
    %vm325 = vcmp.eq.s32.totalorder %v54, %v324
    %vm326 = vcmp.eq.s32.totalorder %v55, %v324
    %vm327 = vcmp.eq.s32.totalorder %v56, %v324
    %vm328 = vcmp.eq.s32.totalorder %v57, %v324
    %vm329 = vcmp.eq.s32.totalorder %v58, %v324
    %vm330 = vcmp.eq.s32.totalorder %v59, %v324
    %vm331 = vcmp.eq.s32.totalorder %v60, %v324
    %vm332 = vcmp.eq.s32.totalorder %v61, %v324
    %vm333 = vcmp.eq.s32.totalorder %v62, %v324
    %vm334 = vcmp.eq.s32.totalorder %v63, %v324
    %vm335 = vcmp.eq.s32.totalorder %v64, %v324
    %vm336 = vcmp.eq.s32.totalorder %v65, %v324
    %vm337 = vcmp.eq.s32.totalorder %v66, %v324
    %vm338 = vcmp.eq.s32.totalorder %v67, %v324
    %vm339 = vcmp.eq.s32.totalorder %v68, %v324
    %vm340 = vcmp.eq.s32.totalorder %v69, %v324
    %v341 = vsel %vm325, 1, 0
    %v342 = vsel %vm326, 1, 0
    %v343 = vsel %vm327, 1, 0
    %v344 = vsel %vm328, 1, 0
    %v345 = vsel %vm329, 1, 0
    %v346 = vsel %vm330, 1, 0
    %v347 = vsel %vm331, 1, 0
    %v348 = vsel %vm332, 1, 0
    %v349 = vsel %vm333, 1, 0
    %v350 = vsel %vm334, 1, 0
    %v351 = vsel %vm335, 1, 0
    %v352 = vsel %vm336, 1, 0
    %v353 = vsel %vm337, 1, 0
    %v354 = vsel %vm338, 1, 0
    %v355 = vsel %vm339, 1, 0
    %v356 = vsel %vm340, 1, 0
    %v357 = vcvt.s32.f32 %v341
    %v358 = vcvt.s32.f32 %v342
    %v359 = vcvt.s32.f32 %v343
    %v360 = vcvt.s32.f32 %v344
    %v361 = vcvt.s32.f32 %v345
    %v362 = vcvt.s32.f32 %v346
    %v363 = vcvt.s32.f32 %v347
    %v364 = vcvt.s32.f32 %v348
    %v365 = vcvt.s32.f32 %v349
    %v366 = vcvt.s32.f32 %v350
    %v367 = vcvt.s32.f32 %v351
    %v368 = vcvt.s32.f32 %v352
    %v369 = vcvt.s32.f32 %v353
    %v370 = vcvt.s32.f32 %v354
    %v371 = vcvt.s32.f32 %v355
    %v372 = vcvt.s32.f32 %v356
    %v373 = vld [vmem:[#allocation5] sm:$0xff]
    %v374 = vld [vmem:[#allocation5 + $0x8] sm:$0xff]
    %v375 = vld [vmem:[#allocation5 + $0x10] sm:$0xff]
    %v376 = vld [vmem:[#allocation5 + $0x18] sm:$0xff]
    %377 = vmatprep.subr.mxu0 0.0
    %378 = vmatpush1.msra.mxu0 %v372
    %379 = vmatprep.subr.mxu0 0.0
    %380 = vmatpush1.msra.mxu0 %v371
    %381 = vmatprep.subr.mxu0 0.0
    %382 = vmatpush1.msra.mxu0 %v370
    %383 = vmatprep.subr.mxu0 0.0
    %384 = vmatpush1.msra.mxu0 %v369
    %385 = vmatprep.subr.mxu0 0.0
    %386 = vmatpush1.msra.mxu0 %v368
    %387 = vmatprep.subr.mxu0 0.0
    %388 = vmatpush1.msra.mxu0 %v367
    %389 = vmatprep.subr.mxu0 0.0
    %390 = vmatpush1.msra.mxu0 %v366
    %391 = vmatprep.subr.mxu0 0.0
    %392 = vmatpush1.msra.mxu0 %v365
    %393 = vmatprep.subr.mxu0 0.0
    %394 = vmatpush1.msra.mxu0 %v364
    %395 = vmatprep.subr.mxu0 0.0
    %396 = vmatpush1.msra.mxu0 %v363
    %397 = vmatprep.subr.mxu0 0.0
    %398 = vmatpush1.msra.mxu0 %v362
    %399 = vmatprep.subr.mxu0 0.0
    %400 = vmatpush1.msra.mxu0 %v361
    %401 = vmatprep.subr.mxu0 0.0
    %402 = vmatpush1.msra.mxu0 %v360
    %403 = vmatprep.subr.mxu0 0.0
    %404 = vmatpush1.msra.mxu0 %v359
    %405 = vmatprep.subr.mxu0 0.0
    %406 = vmatpush1.msra.mxu0 %v358
    %407 = vmatprep.subr.mxu0 0.0
    %408 = vmatpush1.msra.mxu0 %v357
    %409 = vmatprep.subr.mxu0 0.0
    %410 = vmatpush2.msra.mxu0 0.0
    %411 = vmatprep.subr.mxu0 0.0
    %412 = vmatpush2.msra.mxu0 0.0
    %413 = vmatprep.subr.mxu0 0.0
    %414 = vmatpush2.msra.mxu0 0.0
    %415 = vmatprep.subr.mxu0 0.0
    %416 = vmatpush2.msra.mxu0 0.0
    %417 = vmatprep.subr.mxu0 0.0
    %418 = vmatpush2.msra.mxu0 0.0
    %419 = vmatprep.subr.mxu0 0.0
    %420 = vmatpush2.msra.mxu0 0.0
    %421 = vmatprep.subr.mxu0 0.0
    %422 = vmatpush2.msra.mxu0 0.0
    %423 = vmatprep.subr.mxu0 0.0
    %424 = vmatpush2.msra.mxu0 0.0
    %425 = vmatprep.subr.mxu0 0.0
    %426 = vmatpush2.msra.mxu0 0.0
    %427 = vmatprep.subr.mxu0 0.0
    %428 = vmatpush2.msra.mxu0 0.0
    %429 = vmatprep.subr.mxu0 0.0
    %430 = vmatpush2.msra.mxu0 0.0
    %431 = vmatprep.subr.mxu0 0.0
    %432 = vmatpush2.msra.mxu0 0.0
    %433 = vmatprep.subr.mxu0 0.0
    %434 = vmatpush2.msra.mxu0 0.0
    %435 = vmatprep.subr.mxu0 0.0
    %436 = vmatpush2.msra.mxu0 0.0
    %437 = vmatprep.subr.mxu0 0.0
    %438 = vmatpush2.msra.mxu0 0.0
    %439 = vmatprep.subr.mxu0 0.0
    %440 = vmatpush2.msra.mxu0 0.0
    %441 = vmatprep.mubr.f32.mxu0 0.0
    %442 = vmatmul.mubr.f32.gmra.mxu0 %v373
    %v443 = vpop.f32.mrf.mxu0
    %v444 = vadd.f32 0.0, %v443
    %v445 = vpop.f32.mrf.mxu0
    %446 = vmatprep.mubr.f32.mxu0 0.0
    %447 = vmatmul.mubr.f32.gmra.mxu0 %v374
    %v448 = vpop.f32.mrf.mxu0
    %v449 = vadd.f32 0.0, %v448
    %v450 = vpop.f32.mrf.mxu0
    %451 = vmatprep.mubr.f32.mxu0 0.0
    %452 = vmatmul.mubr.f32.gmra.mxu0 %v375
    %v453 = vpop.f32.mrf.mxu0
    %v454 = vadd.f32 0.0, %v453
    %v455 = vpop.f32.mrf.mxu0
    %456 = vmatprep.mubr.f32.mxu0 0.0
    %457 = vmatmul.mubr.f32.gmra.mxu0 %v376
    %v458 = vpop.f32.mrf.mxu0
    %v459 = vadd.f32 0.0, %v458
    %v460 = vpop.f32.mrf.mxu0
    %461 = vdwg.mxu0
    %v462 = vlaneseq
    %v463 = vshrl.u32 %v462, 7
    %v464 = vsub.s32 2, %v463
    %v465 = vrot.slane %v206, %v464
    %v466 = vmul.f32 %v444, %v465
    %v467 = vmul.f32 %v449, %v465
    %v468 = vmul.f32 %v454, %v465
    %v469 = vmul.f32 %v459, %v465
    %v470 = vmul.u32 %v225, 212
    %vm471 = vcmp.lt.s32.totalorder %v470, 0
    %v472 = vsub.s32 0, %v470
    %v473 = vsel %vm471, %v472, %v470
    %v474 = vmul.u32.u64.compose %v473, 2251793058
    %v475 = vextract.low.u32 %v474
    %v476 = vextract.high.u32 %v474
    %vm477 = vc.u32 %v475, 2251793058
    %v478 = vsel %vm477, 1, 0
    %v479 = vadd.s32 %v476, %v478
    %v480 = vshrl.u32 %v479, 19
    %v481 = vmul.u32 %v480, 1000003
    %v482 = vsub.s32 %v473, %v481
    %v483 = vsub.s32 0, %v482
    %v484 = vsel %vm471, %v483, %v482
    %vm485 = vcmp.ne.s32.totalorder %v484, 0
    %vm486 = vcmp.lt.s32.totalorder %v484, 0
    %vm487 = vmand %vm486, %vm485
    %v488 = vadd.s32 %v484, 1000003
    %v489 = vsel %vm487, %v488, %v484
    %v490 = vmul.u32 %v225, 51
    %vm491 = vcmp.lt.s32.totalorder %v490, 0
    %v492 = vsub.s32 0, %v490
    %v493 = vsel %vm491, %v492, %v490
    %v494 = vmul.u32.u64.compose %v493, 2251793058
    %v495 = vextract.low.u32 %v494
    %v496 = vextract.high.u32 %v494
    %vm497 = vc.u32 %v495, 2251793058
    %v498 = vsel %vm497, 1, 0
    %v499 = vadd.s32 %v496, %v498
    %v500 = vshrl.u32 %v499, 19
    %v501 = vmul.u32 %v500, 1000003
    %v502 = vsub.s32 %v493, %v501
    %v503 = vsub.s32 0, %v502
    %v504 = vsel %vm491, %v503, %v502
    %vm505 = vcmp.ne.s32.totalorder %v504, 0
    %vm506 = vcmp.lt.s32.totalorder %v504, 0
    %vm507 = vmand %vm506, %vm505
    %v508 = vadd.s32 %v504, 1000003
    %v509 = vsel %vm507, %v508, %v504
    %v510 = vmul.u32 %v489, 256
    %vm511 = vcmp.lt.s32.totalorder %v510, 0
    %v512 = vsub.s32 0, %v510
    %v513 = vsel %vm511, %v512, %v510
    %v514 = vmul.u32.u64.compose %v513, 2251793058
    %v515 = vextract.low.u32 %v514
    %v516 = vextract.high.u32 %v514
    %vm517 = vc.u32 %v515, 2251793058
    %v518 = vsel %vm517, 1, 0
    %v519 = vadd.s32 %v516, %v518
    %v520 = vshrl.u32 %v519, 19
    %v521 = vmul.u32 %v520, 1000003
    %v522 = vsub.s32 %v513, %v521
    %v523 = vsub.s32 0, %v522
    %v524 = vsel %vm511, %v523, %v522
    %vm525 = vcmp.ne.s32.totalorder %v524, 0
    %vm526 = vcmp.lt.s32.totalorder %v524, 0
    %vm527 = vmand %vm526, %vm525
    %v528 = vadd.s32 %v524, 1000003
    %v529 = vsel %vm527, %v528, %v524
    %v530 = vadd.s32 %v529, %v509
    %v531 = vadd.s32 %v530, 12345
    %vm532 = vcmp.lt.s32.totalorder %v531, 0
    %v533 = vsub.s32 0, %v531
    %v534 = vsel %vm532, %v533, %v531
    %v535 = vmul.u32.u64.compose %v534, 2251793058
    %v536 = vextract.low.u32 %v535
    %v537 = vextract.high.u32 %v535
    %vm538 = vc.u32 %v536, 2251793058
    %v539 = vsel %vm538, 1, 0
    %v540 = vadd.s32 %v537, %v539
    %v541 = vshrl.u32 %v540, 19
    %v542 = vmul.u32 %v541, 1000003
    %v543 = vsub.s32 %v534, %v542
    %v544 = vsub.s32 0, %v543
    %v545 = vsel %vm532, %v544, %v543
    %vm546 = vcmp.ne.s32.totalorder %v545, 0
    %vm547 = vcmp.lt.s32.totalorder %v545, 0
    %vm548 = vmand %vm547, %vm546
    %v549 = vadd.s32 %v545, 1000003
    %v550 = vsel %vm548, %v549, %v545
    %v551 = vand.u32 %v550, 127
    %v552 = vshra.s32 %v550, 7
    %v553 = vand.u32 %v552, 127
    %v554 = vadd.s32 %v551, %v553
    %v555 = vshra.s32 %v550, 14
    %v556 = vadd.s32 %v554, %v555
    %v557 = vand.u32 %v556, 127
    %v558 = vshra.s32 %v556, 7
    %v559 = vadd.s32 %v557, %v558
    %vm560 = vcmp.ge.s32.totalorder %v559, 127
    %v561 = vsub.s32 %v559, 127
    %v562 = vsel %vm560, %v561, %v559
    %v563 = vsel %vm226, 0, %v562
    %v564 = vlaneseq
    %v565 = vshrl.u32 %v564, 7
    %v566 = vsub.s32 0, %v565
    %v567 = vrot.slane %v563, %v566
    %vm568 = vcmp.eq.s32.totalorder %v54, %v567
    %vm569 = vcmp.eq.s32.totalorder %v55, %v567
    %vm570 = vcmp.eq.s32.totalorder %v56, %v567
    %vm571 = vcmp.eq.s32.totalorder %v57, %v567
    %vm572 = vcmp.eq.s32.totalorder %v58, %v567
    %vm573 = vcmp.eq.s32.totalorder %v59, %v567
    %vm574 = vcmp.eq.s32.totalorder %v60, %v567
    %vm575 = vcmp.eq.s32.totalorder %v61, %v567
    %vm576 = vcmp.eq.s32.totalorder %v62, %v567
    %vm577 = vcmp.eq.s32.totalorder %v63, %v567
    %vm578 = vcmp.eq.s32.totalorder %v64, %v567
    %vm579 = vcmp.eq.s32.totalorder %v65, %v567
    %vm580 = vcmp.eq.s32.totalorder %v66, %v567
    %vm581 = vcmp.eq.s32.totalorder %v67, %v567
    %vm582 = vcmp.eq.s32.totalorder %v68, %v567
    %vm583 = vcmp.eq.s32.totalorder %v69, %v567
    %v584 = vsel %vm568, 1, 0
    %v585 = vsel %vm569, 1, 0
    %v586 = vsel %vm570, 1, 0
    %v587 = vsel %vm571, 1, 0
    %v588 = vsel %vm572, 1, 0
    %v589 = vsel %vm573, 1, 0
    %v590 = vsel %vm574, 1, 0
    %v591 = vsel %vm575, 1, 0
    %v592 = vsel %vm576, 1, 0
    %v593 = vsel %vm577, 1, 0
    %v594 = vsel %vm578, 1, 0
    %v595 = vsel %vm579, 1, 0
    %v596 = vsel %vm580, 1, 0
    %v597 = vsel %vm581, 1, 0
    %v598 = vsel %vm582, 1, 0
    %v599 = vsel %vm583, 1, 0
    %v600 = vcvt.s32.f32 %v584
    %v601 = vcvt.s32.f32 %v585
    %v602 = vcvt.s32.f32 %v586
    %v603 = vcvt.s32.f32 %v587
    %v604 = vcvt.s32.f32 %v588
    %v605 = vcvt.s32.f32 %v589
    %v606 = vcvt.s32.f32 %v590
    %v607 = vcvt.s32.f32 %v591
    %v608 = vcvt.s32.f32 %v592
    %v609 = vcvt.s32.f32 %v593
    %v610 = vcvt.s32.f32 %v594
    %v611 = vcvt.s32.f32 %v595
    %v612 = vcvt.s32.f32 %v596
    %v613 = vcvt.s32.f32 %v597
    %v614 = vcvt.s32.f32 %v598
    %v615 = vcvt.s32.f32 %v599
    %616 = vmatprep.subr.mxu0 0.0
    %617 = vmatpush1.msra.mxu0 %v615
    %618 = vmatprep.subr.mxu0 0.0
    %619 = vmatpush1.msra.mxu0 %v614
    %620 = vmatprep.subr.mxu0 0.0
    %621 = vmatpush1.msra.mxu0 %v613
    %622 = vmatprep.subr.mxu0 0.0
    %623 = vmatpush1.msra.mxu0 %v612
    %624 = vmatprep.subr.mxu0 0.0
    %625 = vmatpush1.msra.mxu0 %v611
    %626 = vmatprep.subr.mxu0 0.0
    %627 = vmatpush1.msra.mxu0 %v610
    %628 = vmatprep.subr.mxu0 0.0
    %629 = vmatpush1.msra.mxu0 %v609
    %630 = vmatprep.subr.mxu0 0.0
    %631 = vmatpush1.msra.mxu0 %v608
    %632 = vmatprep.subr.mxu0 0.0
    %633 = vmatpush1.msra.mxu0 %v607
    %634 = vmatprep.subr.mxu0 0.0
    %635 = vmatpush1.msra.mxu0 %v606
    %636 = vmatprep.subr.mxu0 0.0
    %637 = vmatpush1.msra.mxu0 %v605
    %638 = vmatprep.subr.mxu0 0.0
    %639 = vmatpush1.msra.mxu0 %v604
    %640 = vmatprep.subr.mxu0 0.0
    %641 = vmatpush1.msra.mxu0 %v603
    %642 = vmatprep.subr.mxu0 0.0
    %643 = vmatpush1.msra.mxu0 %v602
    %644 = vmatprep.subr.mxu0 0.0
    %645 = vmatpush1.msra.mxu0 %v601
    %646 = vmatprep.subr.mxu0 0.0
    %647 = vmatpush1.msra.mxu0 %v600
    %648 = vmatprep.subr.mxu0 0.0
    %649 = vmatpush2.msra.mxu0 0.0
    %650 = vmatprep.subr.mxu0 0.0
    %651 = vmatpush2.msra.mxu0 0.0
    %652 = vmatprep.subr.mxu0 0.0
    %653 = vmatpush2.msra.mxu0 0.0
    %654 = vmatprep.subr.mxu0 0.0
    %655 = vmatpush2.msra.mxu0 0.0
    %656 = vmatprep.subr.mxu0 0.0
    %657 = vmatpush2.msra.mxu0 0.0
    %658 = vmatprep.subr.mxu0 0.0
    %659 = vmatpush2.msra.mxu0 0.0
    %660 = vmatprep.subr.mxu0 0.0
    %661 = vmatpush2.msra.mxu0 0.0
    %662 = vmatprep.subr.mxu0 0.0
    %663 = vmatpush2.msra.mxu0 0.0
    %664 = vmatprep.subr.mxu0 0.0
    %665 = vmatpush2.msra.mxu0 0.0
    %666 = vmatprep.subr.mxu0 0.0
    %667 = vmatpush2.msra.mxu0 0.0
    %668 = vmatprep.subr.mxu0 0.0
    %669 = vmatpush2.msra.mxu0 0.0
    %670 = vmatprep.subr.mxu0 0.0
    %671 = vmatpush2.msra.mxu0 0.0
    %672 = vmatprep.subr.mxu0 0.0
    %673 = vmatpush2.msra.mxu0 0.0
    %674 = vmatprep.subr.mxu0 0.0
    %675 = vmatpush2.msra.mxu0 0.0
    %676 = vmatprep.subr.mxu0 0.0
    %677 = vmatpush2.msra.mxu0 0.0
    %678 = vmatprep.subr.mxu0 0.0
    %679 = vmatpush2.msra.mxu0 0.0
    %680 = vmatprep.mubr.f32.mxu0 0.0
    %681 = vmatmul.mubr.f32.gmra.mxu0 %v373
    %v682 = vpop.f32.mrf.mxu0
    %v683 = vadd.f32 0.0, %v682
    %v684 = vpop.f32.mrf.mxu0
    %685 = vmatprep.mubr.f32.mxu0 0.0
    %686 = vmatmul.mubr.f32.gmra.mxu0 %v374
    %v687 = vpop.f32.mrf.mxu0
    %v688 = vadd.f32 0.0, %v687
    %v689 = vpop.f32.mrf.mxu0
    %690 = vmatprep.mubr.f32.mxu0 0.0
    %691 = vmatmul.mubr.f32.gmra.mxu0 %v375
    %v692 = vpop.f32.mrf.mxu0
    %v693 = vadd.f32 0.0, %v692
    %v694 = vpop.f32.mrf.mxu0
    %695 = vmatprep.mubr.f32.mxu0 0.0
    %696 = vmatmul.mubr.f32.gmra.mxu0 %v376
    %v697 = vpop.f32.mrf.mxu0
    %v698 = vadd.f32 0.0, %v697
    %v699 = vpop.f32.mrf.mxu0
    %700 = vdwg.mxu0
    %v701 = vlaneseq
    %v702 = vshrl.u32 %v701, 7
    %v703 = vsub.s32 3, %v702
    %v704 = vrot.slane %v206, %v703
    %v705 = vmul.f32 %v683, %v704
    %v706 = vmul.f32 %v688, %v704
    %v707 = vmul.f32 %v693, %v704
    %v708 = vmul.f32 %v698, %v704
    %v709 = vadd.f32 %v466, %v705
    %v710 = vadd.f32 %v467, %v706
    %v711 = vadd.f32 %v468, %v707
    %v712 = vadd.f32 %v469, %v708
    %713 = vst [vmem:[#allocation8] sm:$0xff] %v709
    %714 = vst [vmem:[#allocation8 + $0x8] sm:$0xff] %v710
    %715 = vst [vmem:[#allocation8 + $0x10] sm:$0xff] %v711
    %716 = vst [vmem:[#allocation8 + $0x18] sm:$0xff] %v712
    %717 = vst [vmem:[#allocation8 + $0x1e] sm:$0xc] %v206
    // Predicated region
    $region26: #{tpu_custom_call.1} parent=1 // pred_check
      _
    $region27: #{tpu_custom_call.1} parent=1 // pred_check_branch
      %719 = sbr.rel (0) target = $region29
    $region28: #{tpu_custom_call.1} parent=1 // pred_region
      %s721 = ssub.s32 640, 640
      %722 = vsyncadd [#allocation4], %s721
      %s723 = sshll.u32 [#allocation8], 4
      %s724 = int_to_ptr.vmem [resolvable:$true] %s723
      %729 = dma.vmem_to_hbm [thread:$0]  %s724, 640, %s3, [#allocation4], 128, 128, 8
    $region29: #{tpu_custom_call.1} parent=1 // pred_fallthru
      _
    // Predicated region
    $region30: #{tpu_custom_call.1} parent=1 // pred_check
      _
    $region31: #{tpu_custom_call.1} parent=1 // pred_check_branch
      %731 = sbr.rel (0) target = $region33
    $region32: #{tpu_custom_call.1} parent=1 // pred_region
      %732 = dma.done [#allocation4], 640
    $region33: #{tpu_custom_call.1} parent=1 // pred_fallthru
      _
    %733 = vsyncpa [#allocation3], 1
    %734 = vsyncpa [#allocation6], 1
    %735 = vsyncpa [#allocation4], 1

</llo_original>
